<compile_context>
chip_gen: v5e
topology: v5e:2x2
jax: 0.10.0
libtpu: 0.0.40
codegen_flags: <defaults>
</compile_context>

<pallas_src>
import functools

import jax
import jax.numpy as jnp
from jax import lax
from jax.experimental import pallas as pl
from jax.experimental.pallas import tpu as pltpu


def _fed_decorr_kernel(x_ref, o_ref, gram_acc, colsum_acc, sumsq_acc, *,
                       eps, n, c):
    i = pl.program_id(0)

    @pl.when(i == 0)
    def _init():
        gram_acc[...] = jnp.zeros_like(gram_acc)
        colsum_acc[...] = jnp.zeros_like(colsum_acc)
        sumsq_acc[...] = jnp.zeros_like(sumsq_acc)

    x_blk = x_ref[...]                                # (TN, C_pad), input dtype
    xf = x_blk.astype(jnp.float32)
    colsum_acc[...] += jnp.sum(xf, axis=0, keepdims=True)
    sumsq_acc[...] += jnp.sum(xf * xf, axis=0, keepdims=True)
    # Uncentered Gram accumulated on the MXU; operands stay in input dtype,
    # accumulation in f32.
    gram_acc[...] += lax.dot_general(
        x_blk, x_blk,
        dimension_numbers=(((0,), (0,)), ((), ())),
        preferred_element_type=jnp.float32,
    )

    @pl.when(i == pl.num_programs(0) - 1)
    def _finalize():
        c_pad = gram_acc.shape[0]
        n_f = float(n)
        mean = colsum_acc[...] * (1.0 / n_f)                       # (1, C_pad)
        # Unbiased variance (matches torch.var(dim=0)): (sumsq - N*m^2)/(N-1).
        var = (sumsq_acc[...] - n_f * mean * mean) * (1.0 / float(n - 1))
        d = var + float(eps)
        inv_d = 1.0 / d                                            # (1, C_pad)
        s = lax.rsqrt(d)                                           # (1, C_pad)
        u = mean * s * (n_f ** 0.5)                                # sqrt(N)*m*s
        # Column-vector versions of s and u via sublane broadcast + square
        # transpose (finalize-only XLU work; avoids any (1,C)->(C,1) reshape).
        s_col = jnp.transpose(jnp.broadcast_to(s, (c_pad, c_pad)))  # [j,k]=s_j
        u_col = jnp.transpose(jnp.broadcast_to(u, (c_pad, c_pad)))  # [j,k]=u_j
        # corr_jk = s_j s_k (S_jk - N m_j m_k)
        corr = gram_acc[...] * (s_col * s) - u_col * u
        total_sq = jnp.sum(corr * corr)
        # Analytic diagonal: corr_jj = (N-1) var_j / (eps + var_j).  Zero-padded
        # feature columns have var=0 -> contribute 0, so padding drops out.
        diag = float(n - 1) * var * inv_d                          # (1, C_pad)
        diag_sq = jnp.sum(diag * diag)
        off_mean = (total_sq - diag_sq) * (1.0 / float(c * (c - 1)))
        o_ref[0, 0] = off_mean * (1.0 / n_f)


def fed_decorr_loss(x, eps=1e-8, block_n=256):
    """JAX/Pallas equivalent of FedDecorrLoss.forward for x of shape (N, C)."""
    n, c = x.shape
    if n == 1:
        # PyTorch module returns the python float 0.0 in this case.
        return jnp.float32(0.0)
    # NOTE: c == 1 yields NaN (mean over an empty off-diagonal), same as torch.

    # Pad features to the 128-lane granule and batch rows to the block size
    # (zero rows/columns contribute exactly zero to every accumulated sum).
    c_pad = ((c + 127) // 128) * 128
    tn = max(8, min(((block_n + 7) // 8) * 8, ((n + 7) // 8) * 8))
    n_pad = ((n + tn - 1) // tn) * tn
    if (n_pad, c_pad) != (n, c):
        x = jnp.pad(x, ((0, n_pad - n), (0, c_pad - c)))

    grid = (n_pad // tn,)
    itemsize = jnp.dtype(x.dtype).itemsize
    # VMEM budget: double-buffered input block + (C,C) accumulator + finalize
    # temporaries; clamp to [32 MiB, 64 MiB] so it is safe on v5e/v6e/v7x.
    vmem_bytes = 2 * tn * c_pad * itemsize + 5 * c_pad * c_pad * 4 + (1 << 20)
    vmem_bytes = int(min(max(vmem_bytes, 32 << 20), 64 << 20))

    out = pl.pallas_call(
        functools.partial(_fed_decorr_kernel, eps=float(eps), n=int(n),
                          c=int(c)),
        out_shape=jax.ShapeDtypeStruct((1, 1), jnp.float32),
        grid_spec=pltpu.PrefetchScalarGridSpec(
            num_scalar_prefetch=0,
            grid=grid,
            in_specs=[pl.BlockSpec((tn, c_pad), lambda i: (i, 0))],
            out_specs=pl.BlockSpec(memory_space=pltpu.SMEM),
            scratch_shapes=[
                pltpu.VMEM((c_pad, c_pad), jnp.float32),   # Gram accumulator
                pltpu.VMEM((1, c_pad), jnp.float32),       # column sums
                pltpu.VMEM((1, c_pad), jnp.float32),       # column sums of sq.
            ],
        ),
        compiler_params=pltpu.CompilerParams(
            dimension_semantics=("arbitrary",),
            vmem_limit_bytes=vmem_bytes,
        ),
    )(x)
    return out[0, 0]


def _reference_loss(x, eps=1e-8):
    """Pure-JAX reference mirroring the PyTorch forward exactly."""
    n, c = x.shape
    x = x.astype(jnp.float32)
    x = x - jnp.mean(x, axis=0, keepdims=True)
    var = jnp.var(x, axis=0, keepdims=True, ddof=1)   # unbiased, like torch.var
    x = x / jnp.sqrt(eps + var)
    corr = jnp.matmul(x.T, x, precision=lax.Precision.HIGHEST)
    off_mask = 1.0 - jnp.eye(c, dtype=jnp.float32)
    off_sq_sum = jnp.sum((corr * off_mask) ** 2)
    return off_sq_sum / (c * (c - 1)) / n


if __name__ == "__main__":
    key = jax.random.PRNGKey(0)

    # Case 1: small shape, single grid step, feature-dim padding (32 -> 128).
    N, C = 8, 32
    x = jax.random.normal(key, (N, C), dtype=jnp.float32)
    loss = fed_decorr_loss(x)
    jax.block_until_ready(loss)
    ref = _reference_loss(x)
    assert jnp.allclose(loss, ref, rtol=5e-3, atol=1e-5), (loss, ref)

    # Case 2: multi-step accumulation (grid=3) with row + column padding.
    key2 = jax.random.PRNGKey(1)
    N2, C2 = 40, 96
    x2 = jax.random.normal(key2, (N2, C2), dtype=jnp.float32)
    loss2 = fed_decorr_loss(x2, block_n=16)
    jax.block_until_ready(loss2)
    ref2 = _reference_loss(x2)
    assert jnp.allclose(loss2, ref2, rtol=5e-3, atol=1e-5), (loss2, ref2)

    print("KERNEL_OK")
</pallas_src>

<mosaic_0001>
module attributes {stable_mosaic.version = 11 : i64} {
  func.func @_fed_decorr_kernel(%arg0: i32, %arg1: memref<8x128xf32, #tpu.memory_space<vmem>>, %arg2: memref<1x1xf32, #tpu.memory_space<smem>>, %arg3: memref<128x128xf32, #tpu.memory_space<vmem>>, %arg4: memref<1x128xf32, #tpu.memory_space<vmem>>, %arg5: memref<1x128xf32, #tpu.memory_space<vmem>>) attributes {dimension_semantics = [#tpu.dimension_semantics<arbitrary>], iteration_bounds = array<i64: 1>, scalar_prefetch = 0 : i64, scratch_operands = 3 : i64, tpu.core_type = #tpu.core_type<tc>, window_params = [{transform_indices = @transform_0, window_bounds = array<i64: 8, 128>}, {transform_indices = @transform_1, window_bounds = array<i64: 1, 1>}]} {
    %c0_i32 = arith.constant 0 : i32
    %0 = arith.cmpi eq, %arg0, %c0_i32 : i32
    %1 = arith.extui %0 : i1 to i32
    %c0_i32_0 = arith.constant 0 : i32
    %2 = arith.cmpi ne, %1, %c0_i32_0 : i32
    scf.if %2 {
      %cst_18 = arith.constant 0.000000e+00 : f32
      %22 = vector.broadcast %cst_18 : f32 to vector<128x128xf32>
      %c0_19 = arith.constant 0 : index
      %c0_20 = arith.constant 0 : index
      %23 = vector.load %arg3[%c0_19, %c0_20] : memref<128x128xf32, #tpu.memory_space<vmem>>, vector<128x128xf32>
      tpu.vector_store %arg3[%c0_19, %c0_20], %22 {strides = array<i32>} : memref<128x128xf32, #tpu.memory_space<vmem>>, vector<128x128xf32>,
      %cst_21 = arith.constant 0.000000e+00 : f32
      %24 = vector.broadcast %cst_21 : f32 to vector<1x128xf32>
      %c0_22 = arith.constant 0 : index
      %c0_23 = arith.constant 0 : index
      %25 = vector.load %arg4[%c0_22, %c0_23] : memref<1x128xf32, #tpu.memory_space<vmem>>, vector<1x128xf32>
      tpu.vector_store %arg4[%c0_22, %c0_23], %24 {strides = array<i32>} : memref<1x128xf32, #tpu.memory_space<vmem>>, vector<1x128xf32>,
      %cst_24 = arith.constant 0.000000e+00 : f32
      %26 = vector.broadcast %cst_24 : f32 to vector<1x128xf32>
      %c0_25 = arith.constant 0 : index
      %c0_26 = arith.constant 0 : index
      %27 = vector.load %arg5[%c0_25, %c0_26] : memref<1x128xf32, #tpu.memory_space<vmem>>, vector<1x128xf32>
      tpu.vector_store %arg5[%c0_25, %c0_26], %26 {strides = array<i32>} : memref<1x128xf32, #tpu.memory_space<vmem>>, vector<1x128xf32>,
    } else {
    }
    %c0 = arith.constant 0 : index
    %c0_1 = arith.constant 0 : index
    %3 = vector.load %arg1[%c0, %c0_1] : memref<8x128xf32, #tpu.memory_space<vmem>>, vector<8x128xf32>
    %c0_2 = arith.constant 0 : index
    %c0_3 = arith.constant 0 : index
    %4 = vector.load %arg4[%c0_2, %c0_3] : memref<1x128xf32, #tpu.memory_space<vmem>>, vector<1x128xf32>
    %cst = arith.constant dense<0.000000e+00> : vector<128xf32>
    %5 = vector.multi_reduction <add>, %3, %cst [0] : vector<8x128xf32> to vector<128xf32>
    %6 = vector.shape_cast %5 : vector<128xf32> to vector<1x128xf32>
    %7 = arith.addf %4, %6 : vector<1x128xf32>
    %c0_4 = arith.constant 0 : index
    %c0_5 = arith.constant 0 : index
    %8 = vector.load %arg4[%c0_4, %c0_5] : memref<1x128xf32, #tpu.memory_space<vmem>>, vector<1x128xf32>
    tpu.vector_store %arg4[%c0_4, %c0_5], %7 {strides = array<i32>} : memref<1x128xf32, #tpu.memory_space<vmem>>, vector<1x128xf32>,
    %c0_6 = arith.constant 0 : index
    %c0_7 = arith.constant 0 : index
    %9 = vector.load %arg5[%c0_6, %c0_7] : memref<1x128xf32, #tpu.memory_space<vmem>>, vector<1x128xf32>
    %10 = arith.mulf %3, %3 : vector<8x128xf32>
    %cst_8 = arith.constant dense<0.000000e+00> : vector<128xf32>
    %11 = vector.multi_reduction <add>, %10, %cst_8 [0] : vector<8x128xf32> to vector<128xf32>
    %12 = vector.shape_cast %11 : vector<128xf32> to vector<1x128xf32>
    %13 = arith.addf %9, %12 : vector<1x128xf32>
    %c0_9 = arith.constant 0 : index
    %c0_10 = arith.constant 0 : index
    %14 = vector.load %arg5[%c0_9, %c0_10] : memref<1x128xf32, #tpu.memory_space<vmem>>, vector<1x128xf32>
    tpu.vector_store %arg5[%c0_9, %c0_10], %13 {strides = array<i32>} : memref<1x128xf32, #tpu.memory_space<vmem>>, vector<1x128xf32>,
    %c0_11 = arith.constant 0 : index
    %c0_12 = arith.constant 0 : index
    %15 = vector.load %arg3[%c0_11, %c0_12] : memref<128x128xf32, #tpu.memory_space<vmem>>, vector<128x128xf32>
    %cst_13 = arith.constant dense<0.000000e+00> : vector<128x128xf32>
    %16 = tpu.matmul %3, %3, %cst_13 {dimension_numbers = #tpu.dot_dimension_numbers<[0], [0], [1], [1], [0, 1, 1, 1], [], []>} : vector<8x128xf32>, vector<8x128xf32>, vector<128x128xf32> -> vector<128x128xf32>
    %17 = arith.addf %15, %16 : vector<128x128xf32>
    %c0_14 = arith.constant 0 : index
    %c0_15 = arith.constant 0 : index
    %18 = vector.load %arg3[%c0_14, %c0_15] : memref<128x128xf32, #tpu.memory_space<vmem>>, vector<128x128xf32>
    tpu.vector_store %arg3[%c0_14, %c0_15], %17 {strides = array<i32>} : memref<128x128xf32, #tpu.memory_space<vmem>>, vector<128x128xf32>,
    %c0_i32_16 = arith.constant 0 : i32
    %19 = arith.cmpi eq, %arg0, %c0_i32_16 : i32
    %20 = arith.extui %19 : i1 to i32
    %c0_i32_17 = arith.constant 0 : i32
    %21 = arith.cmpi ne, %20, %c0_i32_17 : i32
    scf.if %21 {
      %c0_18 = arith.constant 0 : index
      %c0_19 = arith.constant 0 : index
      %22 = vector.load %arg4[%c0_18, %c0_19] : memref<1x128xf32, #tpu.memory_space<vmem>>, vector<1x128xf32>
      %cst_20 = arith.constant 1.250000e-01 : f32
      %23 = vector.broadcast %cst_20 : f32 to vector<1x128xf32>
      %24 = arith.mulf %22, %23 : vector<1x128xf32>
      %c0_21 = arith.constant 0 : index
      %c0_22 = arith.constant 0 : index
      %25 = vector.load %arg5[%c0_21, %c0_22] : memref<1x128xf32, #tpu.memory_space<vmem>>, vector<1x128xf32>
      %cst_23 = arith.constant 8.000000e+00 : f32
      %26 = vector.broadcast %cst_23 : f32 to vector<1x128xf32>
      %27 = arith.mulf %26, %24 : vector<1x128xf32>
      %28 = arith.mulf %27, %24 : vector<1x128xf32>
      %29 = arith.subf %25, %28 : vector<1x128xf32>
      %cst_24 = arith.constant 0.142857149 : f32
      %30 = vector.broadcast %cst_24 : f32 to vector<1x128xf32>
      %31 = arith.mulf %29, %30 : vector<1x128xf32>
      %cst_25 = arith.constant 9.99999993E-9 : f32
      %32 = vector.broadcast %cst_25 : f32 to vector<1x128xf32>
      %33 = arith.addf %31, %32 : vector<1x128xf32>
      %cst_26 = arith.constant 1.000000e+00 : f32
      %34 = vector.broadcast %cst_26 : f32 to vector<1x128xf32>
      %35 = arith.divf %34, %33 : vector<1x128xf32>
      %36 = math.rsqrt %33 : vector<1x128xf32>
      %37 = arith.mulf %24, %36 : vector<1x128xf32>
      %cst_27 = arith.constant 2.82842708 : f32
      %38 = vector.broadcast %cst_27 : f32 to vector<1x128xf32>
      %39 = arith.mulf %37, %38 : vector<1x128xf32>
      %40 = vector.shape_cast %36 : vector<1x128xf32> to vector<1x128xf32>
      %41 = vector.broadcast %40 : vector<1x128xf32> to vector<128x128xf32>
      %42 = tpu.transpose %41, [1, 0] : vector<128x128xf32> -> vector<128x128xf32>
      %43 = vector.shape_cast %39 : vector<1x128xf32> to vector<1x128xf32>
      %44 = vector.broadcast %43 : vector<1x128xf32> to vector<128x128xf32>
      %45 = tpu.transpose %44, [1, 0] : vector<128x128xf32> -> vector<128x128xf32>
      %c0_28 = arith.constant 0 : index
      %c0_29 = arith.constant 0 : index
      %46 = vector.load %arg3[%c0_28, %c0_29] : memref<128x128xf32, #tpu.memory_space<vmem>>, vector<128x128xf32>
      %47 = vector.broadcast %36 : vector<1x128xf32> to vector<128x128xf32>
      %48 = arith.mulf %42, %47 : vector<128x128xf32>
      %49 = arith.mulf %46, %48 : vector<128x128xf32>
      %50 = vector.broadcast %39 : vector<1x128xf32> to vector<128x128xf32>
      %51 = arith.mulf %45, %50 : vector<128x128xf32>
      %52 = arith.subf %49, %51 : vector<128x128xf32>
      %53 = arith.mulf %52, %52 : vector<128x128xf32>
      %54 = vector.shape_cast %53 : vector<128x128xf32> to vector<1x128x128xf32>
      %cst_30 = arith.constant dense<0.000000e+00> : vector<1xf32>
      %55 = vector.multi_reduction <add>, %54, %cst_30 [1, 2] : vector<1x128x128xf32> to vector<1xf32>
      %56 = vector.shape_cast %55 : vector<1xf32> to vector<1x1x1xf32>
      %57 = vector.extract %56[0, 0, 0] : f32 from vector<1x1x1xf32>
      %cst_31 = arith.constant 7.000000e+00 : f32
      %58 = vector.broadcast %cst_31 : f32 to vector<1x128xf32>
      %59 = arith.mulf %58, %31 : vector<1x128xf32>
      %60 = arith.mulf %59, %35 : vector<1x128xf32>
      %61 = arith.mulf %60, %60 : vector<1x128xf32>
      %62 = vector.shape_cast %61 : vector<1x128xf32> to vector<1x1x128xf32>
      %cst_32 = arith.constant dense<0.000000e+00> : vector<1xf32>
      %63 = vector.multi_reduction <add>, %62, %cst_32 [1, 2] : vector<1x1x128xf32> to vector<1xf32>
      %64 = vector.shape_cast %63 : vector<1xf32> to vector<1x1x1xf32>
      %65 = vector.extract %64[0, 0, 0] : f32 from vector<1x1x1xf32>
      %66 = arith.subf %57, %65 : f32
      %cst_33 = arith.constant 0.00100806449 : f32
      %67 = arith.mulf %66, %cst_33 : f32
      %cst_34 = arith.constant 1.250000e-01 : f32
      %68 = arith.mulf %67, %cst_34 : f32
      %c0_35 = arith.constant 0 : index
      %c0_36 = arith.constant 0 : index
      %69 = memref.load %arg2[%c0_35, %c0_36] : memref<1x1xf32, #tpu.memory_space<smem>>
      memref.store %68, %arg2[%c0_35, %c0_36] : memref<1x1xf32, #tpu.memory_space<smem>>
    } else {
    }
    return
  }
  func.func @transform_0(%arg0: i32) -> (i32, i32) {
    %c0_i32 = arith.constant 0 : i32
    %c0_i32_0 = arith.constant 0 : i32
    return %arg0, %c0_i32 : i32, i32
  }
  func.func @transform_1(%arg0: i32) -> (i32, i32) {
    %c0_i32 = arith.constant 0 : i32
    %c0_i32_0 = arith.constant 0 : i32
    %c0_i32_1 = arith.constant 0 : i32
    return %c0_i32, %c0_i32_0 : i32, i32
  }
}

</mosaic_0001>

<llo_original>
// kernel: tpu_custom_call.1
$region0: #{tpu_custom_call.1}
  #allocation0 [shape = 'u32[]', space=smem, size = 0x4, offset = 0x4, fixed_abs, tag = 'smem constant byte address 0x4 - core index']
  #allocation1 [shape = 'u32[72,128]{1,0:T(1,128)}', space=vmem, size = 0x9000, scoped, tag = 'internal scratch']
  #allocation2 [shape = 'f32[128,128]{1,0:T(8,128)}', space=vmem, size = 0x10000, scoped, tag = 'scratch operand']
  #allocation3 [shape = 'f32[1,128]{1,0:T(1,128)}', space=vmem, size = 0x200, scoped, tag = 'scratch operand']
  #allocation4 [shape = 'f32[1,128]{1,0:T(1,128)}', space=vmem, size = 0x200, scoped, tag = 'scratch operand']
  %s0 = inlined_call_operand.hbm [shape: f32[8,128], index: 0, kind: input, shape index: {}]
  %s1 = inlined_call_operand.hbm [shape: f32[1,1], index: 1, kind: output, shape index: {}]
  %s2 = sld [smem:[#allocation0]]
  $region26: #{tpu_custom_call.1} parent=0
    _
  %s4 = ssub.s32 1, %s2
  %s5 = scalar_select 0, %s4, %s2
  $region1: #{tpu_custom_call.1} parent=0
    #allocation5 [shape = 'u8[4096]{0}', space=vmem, size = 0x1000, scoped, tag = 'input window, operand 0, single buffered']
    #allocation6 [shape = 's32[1]{0}', space=sflag, size = 0x4, scoped, tag = 'scoped memory for tpu_custom_call.1']
    #allocation7 [shape = 's32[1]{0}', space=sflag, size = 0x4, scoped, tag = 'scoped memory for tpu_custom_call.1']
    #allocation8 [shape = 'u8[512]{0}', space=smem, size = 0x200, scoped, tag = 'output window, operand 0, single buffered']
    %6 = vsyncpa [#allocation6], 0
    %7 = vsyncpa [#allocation7], 0
    // Predicated region
    $region2: #{tpu_custom_call.1} parent=1 // pred_check
      _
    $region3: #{tpu_custom_call.1} parent=1 // pred_check_branch
      %9 = sbr.rel (0) target = $region5
    $region4: #{tpu_custom_call.1} parent=1 // pred_region
      %11 = vsyncadd [#allocation6], 0
      %s13 = sshll.u32 %s0, 4
      %s14 = int_to_ptr.hbm [resolvable:$true] %s13
      %s15 = sshll.u32 [#allocation5], 4
      %s16 = int_to_ptr.vmem [resolvable:$true] %s15
      %18 = dma.hbm_to_vmem [thread:$0]  %s14, 128, %s16, [#allocation6]
    $region5: #{tpu_custom_call.1} parent=1 // pred_fallthru
      _
    // Predicated region
    $region6: #{tpu_custom_call.1} parent=1 // pred_check
      _
    $region7: #{tpu_custom_call.1} parent=1 // pred_check_branch
      %20 = sbr.rel (0) target = $region9
    $region8: #{tpu_custom_call.1} parent=1 // pred_region
      %22 = dma.done [#allocation6], 128
    $region9: #{tpu_custom_call.1} parent=1 // pred_fallthru
      _
    %p23 = scmp.eq.s32.totalorder 0, 0
    // Predicated region
    $region10: #{tpu_custom_call.1} parent=1 // pred_check
      %p24 = pneg %p23
    $region11: #{tpu_custom_call.1} parent=1 // pred_check_branch
      %26 = sbr.rel (%p24) target = $region13
    $region12: #{tpu_custom_call.1} parent=1 // pred_region
      %27 = vst [vmem:[#allocation2] sm:$0xff] 0.0
      %28 = vst [vmem:[#allocation2 + $0x8] sm:$0xff] 0.0
      %29 = vst [vmem:[#allocation2 + $0x10] sm:$0xff] 0.0
      %30 = vst [vmem:[#allocation2 + $0x18] sm:$0xff] 0.0
      %31 = vst [vmem:[#allocation2 + $0x20] sm:$0xff] 0.0
      %32 = vst [vmem:[#allocation2 + $0x28] sm:$0xff] 0.0
      %33 = vst [vmem:[#allocation2 + $0x30] sm:$0xff] 0.0
      %34 = vst [vmem:[#allocation2 + $0x38] sm:$0xff] 0.0
      %35 = vst [vmem:[#allocation2 + $0x40] sm:$0xff] 0.0
      %36 = vst [vmem:[#allocation2 + $0x48] sm:$0xff] 0.0
      %37 = vst [vmem:[#allocation2 + $0x50] sm:$0xff] 0.0
      %38 = vst [vmem:[#allocation2 + $0x58] sm:$0xff] 0.0
      %39 = vst [vmem:[#allocation2 + $0x60] sm:$0xff] 0.0
      %40 = vst [vmem:[#allocation2 + $0x68] sm:$0xff] 0.0
      %41 = vst [vmem:[#allocation2 + $0x70] sm:$0xff] 0.0
      %42 = vst [vmem:[#allocation2 + $0x78] sm:$0xff] 0.0
      %43 = vst [vmem:[#allocation3] sm:$0x1] 0.0
      %44 = vst [vmem:[#allocation4] sm:$0x1] 0.0
    $region13: #{tpu_custom_call.1} parent=1 // pred_fallthru
      _
    %v45 = vld [vmem:[#allocation5] sm:$0xff]
    %v46 = vld [vmem:[#allocation3] sm:$0x1]
    %v47 = vrot.slane %v45, 4
    %v48 = vadd.f32 %v45, %v47
    %v49 = vrot.slane %v48, 2
    %v50 = vadd.f32 %v48, %v49
    %v51 = vrot.slane %v50, 1
    %v52 = vadd.f32 %v50, %v51
    %v53 = vadd.f32 %v46, %v52
    %54 = vst [vmem:[#allocation3] sm:$0x1] %v53
    %v55 = vld [vmem:[#allocation4] sm:$0x1]
    %v56 = vmul.f32 %v45, %v45
    %v57 = vrot.slane %v56, 4
    %v58 = vadd.f32 %v56, %v57
    %v59 = vrot.slane %v58, 2
    %v60 = vadd.f32 %v58, %v59
    %v61 = vrot.slane %v60, 1
    %v62 = vadd.f32 %v60, %v61
    %v63 = vadd.f32 %v55, %v62
    %64 = vst [vmem:[#allocation4] sm:$0x1] %v63
    %v65 = vld [vmem:[#allocation2] sm:$0xff]
    %v66 = vld [vmem:[#allocation2 + $0x8] sm:$0xff]
    %v67 = vld [vmem:[#allocation2 + $0x10] sm:$0xff]
    %v68 = vld [vmem:[#allocation2 + $0x18] sm:$0xff]
    %v69 = vld [vmem:[#allocation2 + $0x20] sm:$0xff]
    %v70 = vld [vmem:[#allocation2 + $0x28] sm:$0xff]
    %v71 = vld [vmem:[#allocation2 + $0x30] sm:$0xff]
    %v72 = vld [vmem:[#allocation2 + $0x38] sm:$0xff]
    %v73 = vld [vmem:[#allocation2 + $0x40] sm:$0xff]
    %v74 = vld [vmem:[#allocation2 + $0x48] sm:$0xff]
    %v75 = vld [vmem:[#allocation2 + $0x50] sm:$0xff]
    %v76 = vld [vmem:[#allocation2 + $0x58] sm:$0xff]
    %v77 = vld [vmem:[#allocation2 + $0x60] sm:$0xff]
    %v78 = vld [vmem:[#allocation2 + $0x68] sm:$0xff]
    %v79 = vld [vmem:[#allocation2 + $0x70] sm:$0xff]
    %v80 = vld [vmem:[#allocation2 + $0x78] sm:$0xff]
    %81 = vxpose.xlu0.b32.start [1/16] %v45, 128
    %82 = vxpose.xlu0.b32.cont [2/16] 0.0, 128
    %83 = vxpose.xlu0.b32.cont [3/16] 0.0, 128
    %84 = vxpose.xlu0.b32.cont [4/16] 0.0, 128
    %85 = vxpose.xlu0.b32.cont [5/16] 0.0, 128
    %86 = vxpose.xlu0.b32.cont [6/16] 0.0, 128
    %87 = vxpose.xlu0.b32.cont [7/16] 0.0, 128
    %88 = vxpose.xlu0.b32.cont [8/16] 0.0, 128
    %89 = vxpose.xlu0.b32.cont [9/16] 0.0, 128
    %90 = vxpose.xlu0.b32.cont [10/16] 0.0, 128
    %91 = vxpose.xlu0.b32.cont [11/16] 0.0, 128
    %92 = vxpose.xlu0.b32.cont [12/16] 0.0, 128
    %93 = vxpose.xlu0.b32.cont [13/16] 0.0, 128
    %94 = vxpose.xlu0.b32.cont [14/16] 0.0, 128
    %95 = vxpose.xlu0.b32.cont [15/16] 0.0, 128
    %96 = vxpose.xlu0.b32.end [16/16] 0.0, 128
    %v97 = vpop.trf.xlu0
    %v98 = vpop.trf.xlu0
    %v99 = vpop.trf.xlu0
    %v100 = vpop.trf.xlu0
    %v101 = vpop.trf.xlu0
    %v102 = vpop.trf.xlu0
    %v103 = vpop.trf.xlu0
    %v104 = vpop.trf.xlu0
    %v105 = vpop.trf.xlu0
    %v106 = vpop.trf.xlu0
    %v107 = vpop.trf.xlu0
    %v108 = vpop.trf.xlu0
    %v109 = vpop.trf.xlu0
    %v110 = vpop.trf.xlu0
    %v111 = vpop.trf.xlu0
    %v112 = vpop.trf.xlu0
    %vm113 = vcmask 64512
    %v115 = vsel %vm113, %v97, 0
    %v118 = vsel %vm113, %v98, 0
    %v121 = vsel %vm113, %v99, 0
    %v124 = vsel %vm113, %v100, 0
    %v127 = vsel %vm113, %v101, 0
    %v130 = vsel %vm113, %v102, 0
    %v133 = vsel %vm113, %v103, 0
    %v136 = vsel %vm113, %v104, 0
    %v139 = vsel %vm113, %v105, 0
    %v142 = vsel %vm113, %v106, 0
    %v145 = vsel %vm113, %v107, 0
    %v148 = vsel %vm113, %v108, 0
    %v151 = vsel %vm113, %v109, 0
    %v154 = vsel %vm113, %v110, 0
    %v157 = vsel %vm113, %v111, 0
    %v160 = vsel %vm113, %v112, 0
    %162 = vmatpush.msra.mxu0 0.0
    %163 = vmatpush.msra.mxu0 0.0
    %164 = vmatpush.msra.mxu0 0.0
    %165 = vmatpush.msra.mxu0 0.0
    %166 = vmatpush.msra.mxu0 0.0
    %167 = vmatpush.msra.mxu0 0.0
    %168 = vmatpush.msra.mxu0 0.0
    %169 = vmatpush.msra.mxu0 0.0
    %170 = vmatpush.msra.mxu0 0.0
    %171 = vmatpush.msra.mxu0 0.0
    %172 = vmatpush.msra.mxu0 0.0
    %173 = vmatpush.msra.mxu0 0.0
    %174 = vmatpush.msra.mxu0 0.0
    %175 = vmatpush.msra.mxu0 0.0
    %176 = vmatpush.msra.mxu0 0.0
    %177 = vmatpush.msra.mxu0 %v45
    %178 = vmatmul.f32.gmra.mxu0 %v115
    %v179 = vpop.f32.mrf.mxu0
    %v180 = vadd.f32 0.0, %v179
    %181 = vmatmul.f32.gmra.mxu0 %v118
    %v182 = vpop.f32.mrf.mxu0
    %v183 = vadd.f32 0.0, %v182
    %184 = vmatmul.f32.gmra.mxu0 %v121
    %v185 = vpop.f32.mrf.mxu0
    %v186 = vadd.f32 0.0, %v185
    %187 = vmatmul.f32.gmra.mxu0 %v124
    %v188 = vpop.f32.mrf.mxu0
    %v189 = vadd.f32 0.0, %v188
    %190 = vmatmul.f32.gmra.mxu0 %v127
    %v191 = vpop.f32.mrf.mxu0
    %v192 = vadd.f32 0.0, %v191
    %193 = vmatmul.f32.gmra.mxu0 %v130
    %v194 = vpop.f32.mrf.mxu0
    %v195 = vadd.f32 0.0, %v194
    %196 = vmatmul.f32.gmra.mxu0 %v133
    %v197 = vpop.f32.mrf.mxu0
    %v198 = vadd.f32 0.0, %v197
    %199 = vmatmul.f32.gmra.mxu0 %v136
    %v200 = vpop.f32.mrf.mxu0
    %v201 = vadd.f32 0.0, %v200
    %202 = vmatmul.f32.gmra.mxu0 %v139
    %v203 = vpop.f32.mrf.mxu0
    %v204 = vadd.f32 0.0, %v203
    %205 = vmatmul.f32.gmra.mxu0 %v142
    %v206 = vpop.f32.mrf.mxu0
    %v207 = vadd.f32 0.0, %v206
    %208 = vmatmul.f32.gmra.mxu0 %v145
    %v209 = vpop.f32.mrf.mxu0
    %v210 = vadd.f32 0.0, %v209
    %211 = vmatmul.f32.gmra.mxu0 %v148
    %v212 = vpop.f32.mrf.mxu0
    %v213 = vadd.f32 0.0, %v212
    %214 = vmatmul.f32.gmra.mxu0 %v151
    %v215 = vpop.f32.mrf.mxu0
    %v216 = vadd.f32 0.0, %v215
    %217 = vmatmul.f32.gmra.mxu0 %v154
    %v218 = vpop.f32.mrf.mxu0
    %v219 = vadd.f32 0.0, %v218
    %220 = vmatmul.f32.gmra.mxu0 %v157
    %v221 = vpop.f32.mrf.mxu0
    %v222 = vadd.f32 0.0, %v221
    %223 = vmatmul.f32.gmra.mxu0 %v160
    %v224 = vpop.f32.mrf.mxu0
    %v225 = vadd.f32 0.0, %v224
    %226 = vdwg.mxu0
    %v227 = vadd.f32 %v65, %v180
    %v228 = vadd.f32 %v66, %v183
    %v229 = vadd.f32 %v67, %v186
    %v230 = vadd.f32 %v68, %v189
    %v231 = vadd.f32 %v69, %v192
    %v232 = vadd.f32 %v70, %v195
    %v233 = vadd.f32 %v71, %v198
    %v234 = vadd.f32 %v72, %v201
    %v235 = vadd.f32 %v73, %v204
    %v236 = vadd.f32 %v74, %v207
    %v237 = vadd.f32 %v75, %v210
    %v238 = vadd.f32 %v76, %v213
    %v239 = vadd.f32 %v77, %v216
    %v240 = vadd.f32 %v78, %v219
    %v241 = vadd.f32 %v79, %v222
    %v242 = vadd.f32 %v80, %v225
    %243 = vst [vmem:[#allocation2] sm:$0xff] %v227
    %244 = vst [vmem:[#allocation2 + $0x8] sm:$0xff] %v228
    %245 = vst [vmem:[#allocation2 + $0x10] sm:$0xff] %v229
    %246 = vst [vmem:[#allocation2 + $0x18] sm:$0xff] %v230
    %247 = vst [vmem:[#allocation2 + $0x20] sm:$0xff] %v231
    %248 = vst [vmem:[#allocation2 + $0x28] sm:$0xff] %v232
    %249 = vst [vmem:[#allocation2 + $0x30] sm:$0xff] %v233
    %250 = vst [vmem:[#allocation2 + $0x38] sm:$0xff] %v234
    %251 = vst [vmem:[#allocation2 + $0x40] sm:$0xff] %v235
    %252 = vst [vmem:[#allocation2 + $0x48] sm:$0xff] %v236
    %253 = vst [vmem:[#allocation2 + $0x50] sm:$0xff] %v237
    %254 = vst [vmem:[#allocation2 + $0x58] sm:$0xff] %v238
    %255 = vst [vmem:[#allocation2 + $0x60] sm:$0xff] %v239
    %256 = vst [vmem:[#allocation2 + $0x68] sm:$0xff] %v240
    %257 = vst [vmem:[#allocation2 + $0x70] sm:$0xff] %v241
    %258 = vst [vmem:[#allocation2 + $0x78] sm:$0xff] %v242
    // Predicated region
    $region14: #{tpu_custom_call.1} parent=1 // pred_check
      %p259 = pneg %p23
    $region15: #{tpu_custom_call.1} parent=1 // pred_check_branch
      %261 = sbr.rel (%p259) target = $region17
    $region16: #{tpu_custom_call.1} parent=1 // pred_region
      %v262 = vld [vmem:[#allocation3] sm:$0x1]
      %v263 = vmul.f32 %v262, 0.125
      %v264 = vld [vmem:[#allocation4] sm:$0x1]
      %v265 = vmul.f32 %v263, 8.0
      %v266 = vmul.f32 %v265, %v263
      %v267 = vsub.f32 %v264, %v266
      %v268 = vmul.f32 %v267, 0.14285715
      %v269 = vadd.f32 %v268, 1e-08
      %v270 = vrcp.pop %v269
      %v271 = vmul.f32 %v269, %v270
      %v272 = vsub.f32 1.0, %v271
      %v273 = vmul.f32 %v270, %v272
      %v274 = vadd.f32 %v270, %v273
      %vm275 = vweird.f32 %v269
      %vm276 = vweird.f32 %v270
      %vm277 = vmor %vm275, %vm276
      %v278 = vsel %vm277, %v270, %v274
      %v279 = vand.u32 2147483647, %v269
      %vm280 = vcmp.eq.f32.partialorder %v279, 8.507059e+37
      %v281 = vand.u32 %v269, 2147483648
      %v282 = vor.u32 1.1754944e-38, %v281
      %v283 = vsel %vm280, %v282, %v278
      %v284 = vmul.f32 1.0, %v283
      %v285 = vrsqrt.pop %v269
      %v286 = vmul.f32 %v285, %v269
      %v287 = vmul.f32 %v286, %v285
      %v288 = vmul.f32 0.5, %v287
      %v289 = vsub.f32 1.5, %v288
      %v290 = vmul.f32 %v285, %v289
      %vm291 = vweird.f32 %v269
      %vm292 = vweird.f32 %v285
      %vm293 = vmor %vm291, %vm292
      %v294 = vsel %vm293, %v285, %v290
      %v295 = vmul.f32 %v263, %v294
      %v296 = vmul.f32 %v295, 2.828427
      %v298 = vperm.slane %v294, 0
      %300 = vxpose.xlu0.b32.start [1/16] %v298, 128
      %301 = vxpose.xlu0.b32.cont [2/16] %v298, 128
      %302 = vxpose.xlu0.b32.cont [3/16] %v298, 128
      %303 = vxpose.xlu0.b32.cont [4/16] %v298, 128
      %304 = vxpose.xlu0.b32.cont [5/16] %v298, 128
      %305 = vxpose.xlu0.b32.cont [6/16] %v298, 128
      %306 = vxpose.xlu0.b32.cont [7/16] %v298, 128
      %307 = vxpose.xlu0.b32.cont [8/16] %v298, 128
      %308 = vxpose.xlu0.b32.cont [9/16] %v298, 128
      %309 = vxpose.xlu0.b32.cont [10/16] %v298, 128
      %310 = vxpose.xlu0.b32.cont [11/16] %v298, 128
      %311 = vxpose.xlu0.b32.cont [12/16] %v298, 128
      %312 = vxpose.xlu0.b32.cont [13/16] %v298, 128
      %313 = vxpose.xlu0.b32.cont [14/16] %v298, 128
      %314 = vxpose.xlu0.b32.cont [15/16] %v298, 128
      %315 = vxpose.xlu0.b32.end [16/16] %v298, 128
      %v316 = vpop.trf.xlu0
      %v317 = vpop.trf.xlu0
      %v318 = vpop.trf.xlu0
      %v319 = vpop.trf.xlu0
      %v320 = vpop.trf.xlu0
      %v321 = vpop.trf.xlu0
      %v322 = vpop.trf.xlu0
      %v323 = vpop.trf.xlu0
      %v324 = vpop.trf.xlu0
      %v325 = vpop.trf.xlu0
      %v326 = vpop.trf.xlu0
      %v327 = vpop.trf.xlu0
      %v328 = vpop.trf.xlu0
      %v329 = vpop.trf.xlu0
      %v330 = vpop.trf.xlu0
      %v331 = vpop.trf.xlu0
      %v333 = vperm.slane %v296, 0
      %335 = vxpose.xlu0.b32.start [1/16] %v333, 128
      %336 = vxpose.xlu0.b32.cont [2/16] %v333, 128
      %337 = vxpose.xlu0.b32.cont [3/16] %v333, 128
      %338 = vxpose.xlu0.b32.cont [4/16] %v333, 128
      %339 = vxpose.xlu0.b32.cont [5/16] %v333, 128
      %340 = vxpose.xlu0.b32.cont [6/16] %v333, 128
      %341 = vxpose.xlu0.b32.cont [7/16] %v333, 128
      %342 = vxpose.xlu0.b32.cont [8/16] %v333, 128
      %343 = vxpose.xlu0.b32.cont [9/16] %v333, 128
      %344 = vxpose.xlu0.b32.cont [10/16] %v333, 128
      %345 = vxpose.xlu0.b32.cont [11/16] %v333, 128
      %346 = vxpose.xlu0.b32.cont [12/16] %v333, 128
      %347 = vxpose.xlu0.b32.cont [13/16] %v333, 128
      %348 = vxpose.xlu0.b32.cont [14/16] %v333, 128
      %349 = vxpose.xlu0.b32.cont [15/16] %v333, 128
      %350 = vxpose.xlu0.b32.end [16/16] %v333, 128
      %v351 = vpop.trf.xlu0
      %v352 = vpop.trf.xlu0
      %v353 = vpop.trf.xlu0
      %v354 = vpop.trf.xlu0
      %v355 = vpop.trf.xlu0
      %v356 = vpop.trf.xlu0
      %v357 = vpop.trf.xlu0
      %v358 = vpop.trf.xlu0
      %v359 = vpop.trf.xlu0
      %v360 = vpop.trf.xlu0
      %v361 = vpop.trf.xlu0
      %v362 = vpop.trf.xlu0
      %v363 = vpop.trf.xlu0
      %v364 = vpop.trf.xlu0
      %v365 = vpop.trf.xlu0
      %v366 = vpop.trf.xlu0
      %v367 = vld [vmem:[#allocation2] sm:$0xff]
      %v368 = vld [vmem:[#allocation2 + $0x8] sm:$0xff]
      %v369 = vld [vmem:[#allocation2 + $0x10] sm:$0xff]
      %v370 = vld [vmem:[#allocation2 + $0x18] sm:$0xff]
      %v371 = vld [vmem:[#allocation2 + $0x20] sm:$0xff]
      %v372 = vld [vmem:[#allocation2 + $0x28] sm:$0xff]
      %v373 = vld [vmem:[#allocation2 + $0x30] sm:$0xff]
      %v374 = vld [vmem:[#allocation2 + $0x38] sm:$0xff]
      %v375 = vld [vmem:[#allocation2 + $0x40] sm:$0xff]
      %v376 = vld [vmem:[#allocation2 + $0x48] sm:$0xff]
      %v377 = vld [vmem:[#allocation2 + $0x50] sm:$0xff]
      %v378 = vld [vmem:[#allocation2 + $0x58] sm:$0xff]
      %v379 = vld [vmem:[#allocation2 + $0x60] sm:$0xff]
      %v380 = vld [vmem:[#allocation2 + $0x68] sm:$0xff]
      %v381 = vld [vmem:[#allocation2 + $0x70] sm:$0xff]
      %v382 = vld [vmem:[#allocation2 + $0x78] sm:$0xff]
      %v383 = vmul.f32 %v316, %v298
      %v384 = vmul.f32 %v317, %v298
      %v385 = vmul.f32 %v318, %v298
      %v386 = vmul.f32 %v319, %v298
      %v387 = vmul.f32 %v320, %v298
      %v388 = vmul.f32 %v321, %v298
      %v389 = vmul.f32 %v322, %v298
      %v390 = vmul.f32 %v323, %v298
      %v391 = vmul.f32 %v324, %v298
      %v392 = vmul.f32 %v325, %v298
      %v393 = vmul.f32 %v326, %v298
      %v394 = vmul.f32 %v327, %v298
      %v395 = vmul.f32 %v328, %v298
      %v396 = vmul.f32 %v329, %v298
      %v397 = vmul.f32 %v330, %v298
      %v398 = vmul.f32 %v331, %v298
      %v399 = vmul.f32 %v367, %v383
      %v400 = vmul.f32 %v368, %v384
      %v401 = vmul.f32 %v369, %v385
      %v402 = vmul.f32 %v370, %v386
      %v403 = vmul.f32 %v371, %v387
      %v404 = vmul.f32 %v372, %v388
      %v405 = vmul.f32 %v373, %v389
      %v406 = vmul.f32 %v374, %v390
      %v407 = vmul.f32 %v375, %v391
      %v408 = vmul.f32 %v376, %v392
      %v409 = vmul.f32 %v377, %v393
      %v410 = vmul.f32 %v378, %v394
      %v411 = vmul.f32 %v379, %v395
      %v412 = vmul.f32 %v380, %v396
      %v413 = vmul.f32 %v381, %v397
      %v414 = vmul.f32 %v382, %v398
      %v415 = vmul.f32 %v351, %v333
      %v416 = vmul.f32 %v352, %v333
      %v417 = vmul.f32 %v353, %v333
      %v418 = vmul.f32 %v354, %v333
      %v419 = vmul.f32 %v355, %v333
      %v420 = vmul.f32 %v356, %v333
      %v421 = vmul.f32 %v357, %v333
      %v422 = vmul.f32 %v358, %v333
      %v423 = vmul.f32 %v359, %v333
      %v424 = vmul.f32 %v360, %v333
      %v425 = vmul.f32 %v361, %v333
      %v426 = vmul.f32 %v362, %v333
      %v427 = vmul.f32 %v363, %v333
      %v428 = vmul.f32 %v364, %v333
      %v429 = vmul.f32 %v365, %v333
      %v430 = vmul.f32 %v366, %v333
      %v431 = vsub.f32 %v399, %v415
      %v432 = vsub.f32 %v400, %v416
      %v433 = vsub.f32 %v401, %v417
      %v434 = vsub.f32 %v402, %v418
      %v435 = vsub.f32 %v403, %v419
      %v436 = vsub.f32 %v404, %v420
      %v437 = vsub.f32 %v405, %v421
      %v438 = vsub.f32 %v406, %v422
      %v439 = vsub.f32 %v407, %v423
      %v440 = vsub.f32 %v408, %v424
      %v441 = vsub.f32 %v409, %v425
      %v442 = vsub.f32 %v410, %v426
      %v443 = vsub.f32 %v411, %v427
      %v444 = vsub.f32 %v412, %v428
      %v445 = vsub.f32 %v413, %v429
      %v446 = vsub.f32 %v414, %v430
      %v447 = vmul.f32 %v431, %v431
      %v448 = vmul.f32 %v432, %v432
      %v449 = vmul.f32 %v433, %v433
      %v450 = vmul.f32 %v434, %v434
      %v451 = vmul.f32 %v435, %v435
      %v452 = vmul.f32 %v436, %v436
      %v453 = vmul.f32 %v437, %v437
      %v454 = vmul.f32 %v438, %v438
      %v455 = vmul.f32 %v439, %v439
      %v456 = vmul.f32 %v440, %v440
      %v457 = vmul.f32 %v441, %v441
      %v458 = vmul.f32 %v442, %v442
      %v459 = vmul.f32 %v443, %v443
      %v460 = vmul.f32 %v444, %v444
      %v461 = vmul.f32 %v445, %v445
      %v462 = vmul.f32 %v446, %v446
      %v463 = vadd.f32 %v447, %v448
      %v464 = vadd.f32 %v463, %v449
      %v465 = vadd.f32 %v464, %v450
      %v466 = vadd.f32 %v465, %v451
      %v467 = vadd.f32 %v466, %v452
      %v468 = vadd.f32 %v467, %v453
      %v469 = vadd.f32 %v468, %v454
      %v470 = vadd.f32 %v469, %v455
      %v471 = vadd.f32 %v470, %v456
      %v472 = vadd.f32 %v471, %v457
      %v473 = vadd.f32 %v472, %v458
      %v474 = vadd.f32 %v473, %v459
      %v475 = vadd.f32 %v474, %v460
      %v476 = vadd.f32 %v475, %v461
      %v477 = vadd.f32 %v476, %v462
      %478 = vadd.xlane.f32.xlu0 %v477
      %v479 = vpop.xlane.xlu0 %478
      %v480 = vrot.slane %v479, 4
      %v481 = vadd.f32 %v479, %v480
      %v482 = vrot.slane %v481, 2
      %v483 = vadd.f32 %v481, %v482
      %v484 = vrot.slane %v483, 1
      %v485 = vadd.f32 %v483, %v484
      %s486 = vtos %v485
      %v487 = vmul.f32 %v268, 7.0
      %v488 = vmul.f32 %v487, %v284
      %v489 = vmul.f32 %v488, %v488
      %vm490 = vcmask 1040384
      %v491 = vsel %vm490, %v489, 0.0
      %492 = vadd.xlane.f32.xlu0 %v491
      %v493 = vpop.xlane.xlu0 %492
      %v494 = vrot.slane %v493, 4
      %v495 = vadd.f32 %v493, %v494
      %v496 = vrot.slane %v495, 2
      %v497 = vadd.f32 %v495, %v496
      %v498 = vrot.slane %v497, 1
      %v499 = vadd.f32 %v497, %v498
      %s500 = vtos %v499
      %s501 = ssub.f32 %s486, %s500
      %s502 = smul.f32 %s501, 0.0010080645
      %s503 = smul.f32 %s502, 0.125
      %s504 = scalar_lea.smem [#allocation8], 0
      %505 = sst [smem:[%s504]] %s503
    $region17: #{tpu_custom_call.1} parent=1 // pred_fallthru
      _
    // Predicated region
    $region18: #{tpu_custom_call.1} parent=1 // pred_check
      _
    $region19: #{tpu_custom_call.1} parent=1 // pred_check_branch
      %507 = sbr.rel (0) target = $region21
    $region20: #{tpu_custom_call.1} parent=1 // pred_region
      %509 = vsyncadd [#allocation7], 0
      %s511 = sshll.u32 %s1, 4
      %s512 = int_to_ptr.hbm [resolvable:$true] %s511
      %514 = dma.smem_to_hbm [#allocation8], 16, %s512, [#allocation7]
    $region21: #{tpu_custom_call.1} parent=1 // pred_fallthru
      _
    // Predicated region
    $region22: #{tpu_custom_call.1} parent=1 // pred_check
      _
    $region23: #{tpu_custom_call.1} parent=1 // pred_check_branch
      %516 = sbr.rel (0) target = $region25
    $region24: #{tpu_custom_call.1} parent=1 // pred_region
      %518 = dma.done [#allocation7], 16
    $region25: #{tpu_custom_call.1} parent=1 // pred_fallthru
      _
    %519 = sfence
    %520 = vsyncpa [#allocation6], 1
    %521 = vsyncpa [#allocation7], 1

</llo_original>
